<compile_context>
chip_gen: v5e
topology: v5e:2x2
jax: 0.10.0
libtpu: 0.0.40
codegen_flags: <defaults>
</compile_context>

<pallas_src>
import functools

import jax
import jax.numpy as jnp
import numpy as np
from jax.experimental import pallas as pl
from jax.experimental.pallas import tpu as pltpu

_LANE = 128          # lane width (last dim)              -> unmasked vector stores
_SUBLANE_BF16 = 16   # bf16 sublane packing (2nd-to-last) for the small-batch tile
_EPS = 1e-5          # torch default for BatchNorm1d / LayerNorm


def _round_up(n, m):
    return ((n + m - 1) // m) * m


# ---------------------------------------------------------------------------
# Fused forward kernel (whole network, activations stay in VMEM/vregs)
# ---------------------------------------------------------------------------

def _make_fused_kernel(plan):
    """plan: static tuple of per-layer descriptors; param refs consumed in order."""

    def kernel(*refs):
        x_ref, o_ref = refs[0], refs[-1]
        prefs = refs[1:-1]
        h = x_ref[...]                       # bf16 input tile straight off the DMA
        idx = 0
        for step in plan:
            t = step[0]
            if t == "linear":
                w = prefs[idx][...]          # bf16 (Kp, Np), zero-padded
                b = prefs[idx + 1][...]      # f32  (1, Np),  zero-padded
                idx += 2
                # astype is a no-op for the bf16 input layer; casts the f32
                # activations of later layers down for the MXU.
                h = jnp.dot(h.astype(jnp.bfloat16), w,
                            preferred_element_type=jnp.float32) + b
            elif t == "affine":              # eval-mode BatchNorm1d (precomputed)
                s = prefs[idx][...]
                sh = prefs[idx + 1][...]
                idx += 2
                h = h.astype(jnp.float32) * s + sh
            elif t == "layer_norm":
                g = prefs[idx][...]
                bt = prefs[idx + 1][...]
                idx += 2
                n_valid, pad_is_zero = step[1], step[2]
                h = h.astype(jnp.float32)
                inv_n = 1.0 / n_valid
                if n_valid == h.shape[-1]:
                    # No padded lanes: straight LayerNorm, no masks at all.
                    mean = jnp.sum(h, axis=-1, keepdims=True) * inv_n
                    diff = h - mean
                else:
                    mask = (jax.lax.broadcasted_iota(jnp.int32, h.shape, 1)
                            < n_valid)
                    if pad_is_zero:
                        # Padded lanes are exactly zero -> unmasked sum is exact.
                        mean = jnp.sum(h, axis=-1, keepdims=True) * inv_n
                    else:
                        mean = jnp.sum(jnp.where(mask, h, 0.0),
                                       axis=-1, keepdims=True) * inv_n
                    diff = jnp.where(mask, h - mean, 0.0)
                var = jnp.sum(diff * diff, axis=-1, keepdims=True) * inv_n
                # Padded gamma/beta are zero, so padded lanes come out as 0.
                h = (h - mean) * jax.lax.rsqrt(var + _EPS) * g + bt
            elif t == "relu":
                h = jnp.maximum(h.astype(jnp.float32), 0.0)
            elif t == "tanh":
                h = jnp.tanh(h.astype(jnp.float32))
            elif t == "sigmoid":
                hf = h.astype(jnp.float32)
                h = 1.0 / (1.0 + jnp.exp(-hf))   # exact (torch parity); exp on EUP
            # "dropout" never appears in the plan (eval-mode identity)
        o_ref[...] = h.astype(o_ref.dtype)

    return kernel


# ---------------------------------------------------------------------------
# Parameter construction (mirrors FullyConnectedModel._build_layers shapes)
# ---------------------------------------------------------------------------

def build_params(key, input_size, num_classes, layer_config):
    """Deterministic synthetic init mirroring the module's layer shapes."""
    params = []
    prev_size = input_size

    def _linear_params(k, fan_in, fan_out):
        kw, kb = jax.random.split(k)
        bound = 1.0 / jnp.sqrt(fan_in)
        w = jax.random.uniform(kw, (fan_in, fan_out), jnp.float32, -bound, bound)
        b = jax.random.uniform(kb, (1, fan_out), jnp.float32, -bound, bound)
        return {"type": "linear", "w": w, "b": b}

    for spec in layer_config:
        t = spec["type"]
        if t == "linear":
            key, sub = jax.random.split(key)
            out_size = spec["size"]
            params.append(_linear_params(sub, prev_size, out_size))
            prev_size = out_size
        elif t in ("relu", "sigmoid", "tanh"):
            params.append({"type": t})
        elif t == "dropout":
            params.append({"type": "dropout", "rate": spec.get("rate", 0.5)})
        elif t == "batch_norm":
            params.append({
                "type": "batch_norm",
                "gamma": jnp.ones((1, prev_size), jnp.float32),
                "beta": jnp.zeros((1, prev_size), jnp.float32),
                "running_mean": jnp.zeros((1, prev_size), jnp.float32),
                "running_var": jnp.ones((1, prev_size), jnp.float32),
            })
        elif t == "layer_norm":
            params.append({
                "type": "layer_norm",
                "gamma": jnp.ones((1, prev_size), jnp.float32),
                "beta": jnp.zeros((1, prev_size), jnp.float32),
            })
        else:
            raise ValueError(f"unknown layer type {t}")

    # Final classifier head (always appended in _build_layers).
    key, sub = jax.random.split(key)
    params.append(_linear_params(sub, prev_size, num_classes))
    return params


def preprocess_params(params, input_size, num_classes):
    """Fold / simplify, pad feature dims to 128, cast matmul weights to bf16."""
    # --- 1) fold eval-BN into preceding Linear, or lower it to a per-feature affine
    descs = []
    feat = input_size
    for p in params:
        t = p["type"]
        if t == "linear":
            descs.append({"type": "linear", "w": p["w"], "b": p["b"]})
            feat = p["w"].shape[1]
        elif t == "batch_norm":
            scale = p["gamma"] / jnp.sqrt(p["running_var"] + _EPS)
            shift = p["beta"] - p["running_mean"] * scale
            if descs and descs[-1]["type"] == "linear":
                lin = dict(descs[-1])
                lin["w"] = lin["w"] * scale                # (K,N) * (1,N)
                lin["b"] = lin["b"] * scale + shift
                descs[-1] = lin
            else:
                descs.append({"type": "affine", "scale": scale, "shift": shift,
                              "feat": feat})
        elif t == "layer_norm":
            descs.append({"type": "layer_norm", "gamma": p["gamma"],
                          "beta": p["beta"], "feat": feat})
        elif t in ("relu", "sigmoid", "tanh"):
            descs.append({"type": t})
        elif t == "dropout":
            # TODO(synk): training-mode dropout (random masking) not implemented;
            # eval-mode dropout is identity, matching nn.Dropout in .eval().
            pass
        else:
            raise ValueError(t)

    # --- 2) pad every feature dim to a multiple of 128 and flatten the param list.
    # Also statically track whether padded lanes hold exact zeros at each point
    # (lets the LayerNorm branch drop its mean mask).  Invariant relied upon by
    # correctness: the final linear's padded K rows are zero, so any non-zero
    # garbage in padded lanes (e.g. 0.5 after a sigmoid) contributes nothing.
    plan = []
    flat = []
    pad_zero = True                     # input is zero-padded
    for d in descs:
        t = d["type"]
        if t == "linear":
            K, N = d["w"].shape
            Kp, Np = _round_up(K, _LANE), _round_up(N, _LANE)
            w = jnp.zeros((Kp, Np), jnp.float32).at[:K, :N].set(d["w"])
            b = jnp.zeros((1, Np), jnp.float32).at[:, :N].set(d["b"])
            plan.append(("linear",))
            flat += [w.astype(jnp.bfloat16), b]            # bf16 weights, f32 bias
            pad_zero = True                                # zero cols + zero bias
        elif t == "affine":
            F = d["feat"]
            Fp = _round_up(F, _LANE)
            s = jnp.zeros((1, Fp), jnp.float32).at[:, :F].set(d["scale"])
            sh = jnp.zeros((1, Fp), jnp.float32).at[:, :F].set(d["shift"])
            plan.append(("affine",))
            flat += [s, sh]
            pad_zero = True                                # zero scale + zero shift
        elif t == "layer_norm":
            F = d["feat"]
            Fp = _round_up(F, _LANE)
            g = jnp.zeros((1, Fp), jnp.float32).at[:, :F].set(d["gamma"])
            bt = jnp.zeros((1, Fp), jnp.float32).at[:, :F].set(d["beta"])
            plan.append(("layer_norm", F, pad_zero))
            flat += [g, bt]
            pad_zero = True                                # zero gamma/beta on pads
        elif t == "sigmoid":
            plan.append(("sigmoid",))
            pad_zero = False                               # sigmoid(0) = 0.5
        else:                                              # relu / tanh preserve 0
            plan.append((t,))

    return {
        "plan": tuple(plan),
        "flat": flat,
        "input_size": input_size,
        "num_classes": num_classes,
        "out_pad": _round_up(num_classes, _LANE),
    }


# ---------------------------------------------------------------------------
# Forward pass: single fused pallas_call, grid over batch-row blocks
# ---------------------------------------------------------------------------

def _choose_tb(batch):
    """Batch row-block size."""
    if batch < 2 * _LANE:
        # Small batch: a single sublane-aligned block (grid=(1,)).
        return _round_up(batch, _SUBLANE_BF16)
    # Large batch: big row blocks (512-row tiles ~85% of HBM roofline vs ~29% at
    # 128), 128/256-multiples for the 256-wide v6e/v7x MXU, capped so the grid
    # keeps >= 2 steps so both v7x TensorCores get work on the "parallel" axis.
    half = (batch // 2) // _LANE * _LANE     # round_down(batch // 2, 128)
    return max(_LANE, min(512, half))


def fully_connected_forward(model, x):
    B = x.shape[0]
    h = x.reshape(B, -1)                      # == torch x.view(x.size(0), -1)
    in_feat = h.shape[1]
    assert in_feat == model["input_size"], (in_feat, model["input_size"])
    in_pad = _round_up(in_feat, _LANE)

    tb = _choose_tb(B)
    b_pad = _round_up(B, tb)

    # bf16 input halves the dominant input DMA (the kernel is HBM-bound on x) and
    # feeds the MXU directly.  Only pad when actually needed -- no separate padded
    # copy of x is materialized for aligned shapes; otherwise one fused jnp.pad.
    h = h.astype(jnp.bfloat16)
    if (b_pad, in_pad) != (B, in_feat):
        h = jnp.pad(h, ((0, b_pad - B), (0, in_pad - in_feat)))

    flat = model["flat"]
    out_pad = model["out_pad"]
    grid = (b_pad // tb,)

    in_specs = [pl.BlockSpec((tb, in_pad), lambda i: (i, 0))]
    # Params are grid-invariant (index_map always (0,0)); whole arrays per step.
    # TODO(synk): single-buffering them (pipeline_mode=pl.Buffered(1)) would halve
    # their VMEM footprint -- negligible here, relevant near v7x's 64 MiB VMEM.
    for p in flat:
        in_specs.append(pl.BlockSpec(p.shape, lambda i: (0, 0)))
    # Output stays f32 (logit parity); lane-dense 128-wide => unmasked vst.
    out_specs = pl.BlockSpec((tb, out_pad), lambda i: (i, 0))

    out = pl.pallas_call(
        _make_fused_kernel(model["plan"]),
        out_shape=jax.ShapeDtypeStruct((b_pad, out_pad), jnp.float32),
        grid=grid,
        in_specs=in_specs,
        out_specs=out_specs,
        compiler_params=pltpu.CompilerParams(
            dimension_semantics=("parallel",)),
    )(h, *flat)

    return out[:B, :model["num_classes"]]


# ---------------------------------------------------------------------------
# Pure-JAX reference (unpadded, unfused, f32) for a correctness check
# ---------------------------------------------------------------------------

def reference_forward(params, x):
    B = x.shape[0]
    h = x.reshape(B, -1).astype(jnp.float32)
    for p in params:
        t = p["type"]
        if t == "linear":
            h = h @ p["w"] + p["b"]
        elif t == "relu":
            h = jnp.maximum(h, 0.0)
        elif t == "sigmoid":
            h = jax.nn.sigmoid(h)
        elif t == "tanh":
            h = jnp.tanh(h)
        elif t == "layer_norm":
            mean = jnp.mean(h, axis=-1, keepdims=True)
            var = jnp.mean((h - mean) ** 2, axis=-1, keepdims=True)
            h = (h - mean) * jax.lax.rsqrt(var + _EPS) * p["gamma"] + p["beta"]
        elif t == "batch_norm":
            h = ((h - p["running_mean"]) * jax.lax.rsqrt(p["running_var"] + _EPS)
                 * p["gamma"] + p["beta"])
        elif t == "dropout":
            pass
    return h


if __name__ == "__main__":
    # Small shapes consistent with the module: x is [B, C, H, W] = [2, 4, 16, 16]
    # -> input_size = 4*16*16 = 1024, num_classes = 10.
    B, C, H, W = 2, 4, 16, 16
    input_size = C * H * W
    num_classes = 10

    layer_config = [
        {"type": "linear", "size": 64},
        {"type": "relu"},
        {"type": "batch_norm"},
        {"type": "linear", "size": 32},
        {"type": "layer_norm"},
        {"type": "tanh"},
        {"type": "dropout", "rate": 0.5},
        {"type": "sigmoid"},
    ]

    key = jax.random.PRNGKey(0)
    key, kx = jax.random.split(key)
    x = jax.random.normal(kx, (B, C, H, W), jnp.float32)

    raw_params = build_params(key, input_size, num_classes, layer_config)
    model = preprocess_params(raw_params, input_size, num_classes)

    fwd = jax.jit(functools.partial(fully_connected_forward, model))
    out = fwd(x)
    jax.block_until_ready(out)
    assert out.shape == (B, num_classes), out.shape

    # Correctness vs. f32 reference (loose tolerance: bf16 input + bf16 weights).
    ref = reference_forward(raw_params, x)
    np.testing.assert_allclose(np.asarray(out), np.asarray(ref),
                               rtol=5e-2, atol=5e-2)

    print("KERNEL_OK")
</pallas_src>

<mosaic_0001>
module attributes {stable_mosaic.version = 11 : i64} {
  func.func @kernel(%arg0: i32, %arg1: memref<16x1024xbf16, #tpu.memory_space<vmem>>, %arg2: memref<1024x128xbf16, #tpu.memory_space<vmem>>, %arg3: memref<1x128xf32, #tpu.memory_space<vmem>>, %arg4: memref<1x128xf32, #tpu.memory_space<vmem>>, %arg5: memref<1x128xf32, #tpu.memory_space<vmem>>, %arg6: memref<128x128xbf16, #tpu.memory_space<vmem>>, %arg7: memref<1x128xf32, #tpu.memory_space<vmem>>, %arg8: memref<1x128xf32, #tpu.memory_space<vmem>>, %arg9: memref<1x128xf32, #tpu.memory_space<vmem>>, %arg10: memref<128x128xbf16, #tpu.memory_space<vmem>>, %arg11: memref<1x128xf32, #tpu.memory_space<vmem>>, %arg12: memref<16x128xf32, #tpu.memory_space<vmem>>) attributes {dimension_semantics = [#tpu.dimension_semantics<parallel>], iteration_bounds = array<i64: 1>, scalar_prefetch = 0 : i64, scratch_operands = 0 : i64, tpu.core_type = #tpu.core_type<tc>, window_params = [{transform_indices = @transform_0, window_bounds = array<i64: 16, 1024>}, {pipeline_mode = #tpu.pipeline_mode<synchronous>, transform_indices = @transform_1, window_bounds = array<i64: 1024, 128>}, {pipeline_mode = #tpu.pipeline_mode<synchronous>, transform_indices = @transform_2, window_bounds = array<i64: 1, 128>}, {pipeline_mode = #tpu.pipeline_mode<synchronous>, transform_indices = @transform_3, window_bounds = array<i64: 1, 128>}, {pipeline_mode = #tpu.pipeline_mode<synchronous>, transform_indices = @transform_4, window_bounds = array<i64: 1, 128>}, {pipeline_mode = #tpu.pipeline_mode<synchronous>, transform_indices = @transform_5, window_bounds = array<i64: 128, 128>}, {pipeline_mode = #tpu.pipeline_mode<synchronous>, transform_indices = @transform_6, window_bounds = array<i64: 1, 128>}, {pipeline_mode = #tpu.pipeline_mode<synchronous>, transform_indices = @transform_7, window_bounds = array<i64: 1, 128>}, {pipeline_mode = #tpu.pipeline_mode<synchronous>, transform_indices = @transform_8, window_bounds = array<i64: 1, 128>}, {pipeline_mode = #tpu.pipeline_mode<synchronous>, transform_indices = @transform_9, window_bounds = array<i64: 128, 128>}, {pipeline_mode = #tpu.pipeline_mode<synchronous>, transform_indices = @transform_10, window_bounds = array<i64: 1, 128>}, {transform_indices = @transform_11, window_bounds = array<i64: 16, 128>}]} {
    %c0 = arith.constant 0 : index
    %c0_0 = arith.constant 0 : index
    %0 = vector.load %arg1[%c0, %c0_0] : memref<16x1024xbf16, #tpu.memory_space<vmem>>, vector<16x1024xbf16>
    %c0_1 = arith.constant 0 : index
    %c0_2 = arith.constant 0 : index
    %1 = vector.load %arg2[%c0_1, %c0_2] : memref<1024x128xbf16, #tpu.memory_space<vmem>>, vector<1024x128xbf16>
    %c0_3 = arith.constant 0 : index
    %c0_4 = arith.constant 0 : index
    %2 = vector.load %arg3[%c0_3, %c0_4] : memref<1x128xf32, #tpu.memory_space<vmem>>, vector<1x128xf32>
    %cst = arith.constant dense<0.000000e+00> : vector<16x128xf32>
    %3 = tpu.matmul %0, %1, %cst {dimension_numbers = #tpu.dot_dimension_numbers<[1], [0], [0], [1], [0, 0, 1, 1], [], []>} : vector<16x1024xbf16>, vector<1024x128xbf16>, vector<16x128xf32> -> vector<16x128xf32>
    %4 = vector.broadcast %2 : vector<1x128xf32> to vector<16x128xf32>
    %5 = arith.addf %3, %4 : vector<16x128xf32>
    %cst_5 = arith.constant 0.000000e+00 : f32
    %6 = vector.broadcast %cst_5 : f32 to vector<16x128xf32>
    %7 = arith.maximumf %5, %6 : vector<16x128xf32>
    %c0_6 = arith.constant 0 : index
    %c0_7 = arith.constant 0 : index
    %8 = vector.load %arg4[%c0_6, %c0_7] : memref<1x128xf32, #tpu.memory_space<vmem>>, vector<1x128xf32>
    %c0_8 = arith.constant 0 : index
    %c0_9 = arith.constant 0 : index
    %9 = vector.load %arg5[%c0_8, %c0_9] : memref<1x128xf32, #tpu.memory_space<vmem>>, vector<1x128xf32>
    %10 = vector.broadcast %8 : vector<1x128xf32> to vector<16x128xf32>
    %11 = arith.mulf %7, %10 : vector<16x128xf32>
    %12 = vector.broadcast %9 : vector<1x128xf32> to vector<16x128xf32>
    %13 = arith.addf %11, %12 : vector<16x128xf32>
    %c0_10 = arith.constant 0 : index
    %c0_11 = arith.constant 0 : index
    %14 = vector.load %arg6[%c0_10, %c0_11] : memref<128x128xbf16, #tpu.memory_space<vmem>>, vector<128x128xbf16>
    %c0_12 = arith.constant 0 : index
    %c0_13 = arith.constant 0 : index
    %15 = vector.load %arg7[%c0_12, %c0_13] : memref<1x128xf32, #tpu.memory_space<vmem>>, vector<1x128xf32>
    %16 = arith.truncf %13 : vector<16x128xf32> to vector<16x128xbf16>
    %cst_14 = arith.constant dense<0.000000e+00> : vector<16x128xf32>
    %17 = tpu.matmul %16, %14, %cst_14 {dimension_numbers = #tpu.dot_dimension_numbers<[1], [0], [0], [1], [0, 0, 1, 1], [], []>} : vector<16x128xbf16>, vector<128x128xbf16>, vector<16x128xf32> -> vector<16x128xf32>
    %18 = vector.broadcast %15 : vector<1x128xf32> to vector<16x128xf32>
    %19 = arith.addf %17, %18 : vector<16x128xf32>
    %c0_15 = arith.constant 0 : index
    %c0_16 = arith.constant 0 : index
    %20 = vector.load %arg8[%c0_15, %c0_16] : memref<1x128xf32, #tpu.memory_space<vmem>>, vector<1x128xf32>
    %c0_17 = arith.constant 0 : index
    %c0_18 = arith.constant 0 : index
    %21 = vector.load %arg9[%c0_17, %c0_18] : memref<1x128xf32, #tpu.memory_space<vmem>>, vector<1x128xf32>
    %22 = tpu.iota {dimensions = array<i32: 1>} : vector<16x128xi32>
    %c32_i32 = arith.constant 32 : i32
    %23 = vector.broadcast %c32_i32 : i32 to vector<16x128xi32>
    %24 = arith.cmpi slt, %22, %23 : vector<16x128xi32>
    %cst_19 = arith.constant dense<0.000000e+00> : vector<16xf32>
    %25 = vector.multi_reduction <add>, %19, %cst_19 [1] : vector<16x128xf32> to vector<16xf32>
    %26 = vector.shape_cast %25 : vector<16xf32> to vector<16x1xf32>
    %cst_20 = arith.constant 3.125000e-02 : f32
    %27 = vector.broadcast %cst_20 : f32 to vector<16x1xf32>
    %28 = arith.mulf %26, %27 : vector<16x1xf32>
    %29 = vector.broadcast %28 : vector<16x1xf32> to vector<16x128xf32>
    %30 = arith.subf %19, %29 : vector<16x128xf32>
    %cst_21 = arith.constant 0.000000e+00 : f32
    %31 = vector.broadcast %cst_21 : f32 to vector<16x128xf32>
    %32 = arith.select %24, %30, %31 : vector<16x128xi1>, vector<16x128xf32>
    %33 = arith.mulf %32, %32 : vector<16x128xf32>
    %cst_22 = arith.constant dense<0.000000e+00> : vector<16xf32>
    %34 = vector.multi_reduction <add>, %33, %cst_22 [1] : vector<16x128xf32> to vector<16xf32>
    %35 = vector.shape_cast %34 : vector<16xf32> to vector<16x1xf32>
    %cst_23 = arith.constant 3.125000e-02 : f32
    %36 = vector.broadcast %cst_23 : f32 to vector<16x1xf32>
    %37 = arith.mulf %35, %36 : vector<16x1xf32>
    %38 = vector.broadcast %28 : vector<16x1xf32> to vector<16x128xf32>
    %39 = arith.subf %19, %38 : vector<16x128xf32>
    %cst_24 = arith.constant 9.99999974E-6 : f32
    %40 = vector.broadcast %cst_24 : f32 to vector<16x1xf32>
    %41 = arith.addf %37, %40 : vector<16x1xf32>
    %42 = math.rsqrt %41 : vector<16x1xf32>
    %43 = vector.broadcast %42 : vector<16x1xf32> to vector<16x128xf32>
    %44 = arith.mulf %39, %43 : vector<16x128xf32>
    %45 = vector.broadcast %20 : vector<1x128xf32> to vector<16x128xf32>
    %46 = arith.mulf %44, %45 : vector<16x128xf32>
    %47 = vector.broadcast %21 : vector<1x128xf32> to vector<16x128xf32>
    %48 = arith.addf %46, %47 : vector<16x128xf32>
    %49 = math.tanh %48 : vector<16x128xf32>
    %cst_25 = arith.constant 0.000000e+00 : f32
    %50 = vector.broadcast %cst_25 : f32 to vector<16x128xf32>
    %51 = arith.subf %50, %49 : vector<16x128xf32>
    %52 = math.exp %51 : vector<16x128xf32>
    %cst_26 = arith.constant 1.000000e+00 : f32
    %53 = vector.broadcast %cst_26 : f32 to vector<16x128xf32>
    %54 = arith.addf %53, %52 : vector<16x128xf32>
    %cst_27 = arith.constant 1.000000e+00 : f32
    %55 = vector.broadcast %cst_27 : f32 to vector<16x128xf32>
    %56 = arith.divf %55, %54 : vector<16x128xf32>
    %c0_28 = arith.constant 0 : index
    %c0_29 = arith.constant 0 : index
    %57 = vector.load %arg10[%c0_28, %c0_29] : memref<128x128xbf16, #tpu.memory_space<vmem>>, vector<128x128xbf16>
    %c0_30 = arith.constant 0 : index
    %c0_31 = arith.constant 0 : index
    %58 = vector.load %arg11[%c0_30, %c0_31] : memref<1x128xf32, #tpu.memory_space<vmem>>, vector<1x128xf32>
    %59 = arith.truncf %56 : vector<16x128xf32> to vector<16x128xbf16>
    %cst_32 = arith.constant dense<0.000000e+00> : vector<16x128xf32>
    %60 = tpu.matmul %59, %57, %cst_32 {dimension_numbers = #tpu.dot_dimension_numbers<[1], [0], [0], [1], [0, 0, 1, 1], [], []>} : vector<16x128xbf16>, vector<128x128xbf16>, vector<16x128xf32> -> vector<16x128xf32>
    %61 = vector.broadcast %58 : vector<1x128xf32> to vector<16x128xf32>
    %62 = arith.addf %60, %61 : vector<16x128xf32>
    %c0_33 = arith.constant 0 : index
    %c0_34 = arith.constant 0 : index
    %63 = vector.load %arg12[%c0_33, %c0_34] : memref<16x128xf32, #tpu.memory_space<vmem>>, vector<16x128xf32>
    tpu.vector_store %arg12[%c0_33, %c0_34], %62 {strides = array<i32>} : memref<16x128xf32, #tpu.memory_space<vmem>>, vector<16x128xf32>,
    return
  }
  func.func @transform_0(%arg0: i32) -> (i32, i32) {
    %c0_i32 = arith.constant 0 : i32
    %c0_i32_0 = arith.constant 0 : i32
    return %arg0, %c0_i32 : i32, i32
  }
  func.func @transform_1(%arg0: i32) -> (i32, i32) {
    %c0_i32 = arith.constant 0 : i32
    %c0_i32_0 = arith.constant 0 : i32
    %c0_i32_1 = arith.constant 0 : i32
    return %c0_i32, %c0_i32_0 : i32, i32
  }
  func.func @transform_2(%arg0: i32) -> (i32, i32) {
    %c0_i32 = arith.constant 0 : i32
    %c0_i32_0 = arith.constant 0 : i32
    %c0_i32_1 = arith.constant 0 : i32
    return %c0_i32, %c0_i32_0 : i32, i32
  }
  func.func @transform_3(%arg0: i32) -> (i32, i32) {
    %c0_i32 = arith.constant 0 : i32
    %c0_i32_0 = arith.constant 0 : i32
    %c0_i32_1 = arith.constant 0 : i32
    return %c0_i32, %c0_i32_0 : i32, i32
  }
  func.func @transform_4(%arg0: i32) -> (i32, i32) {
    %c0_i32 = arith.constant 0 : i32
    %c0_i32_0 = arith.constant 0 : i32
    %c0_i32_1 = arith.constant 0 : i32
    return %c0_i32, %c0_i32_0 : i32, i32
  }
  func.func @transform_5(%arg0: i32) -> (i32, i32) {
    %c0_i32 = arith.constant 0 : i32
    %c0_i32_0 = arith.constant 0 : i32
    %c0_i32_1 = arith.constant 0 : i32
    return %c0_i32, %c0_i32_0 : i32, i32
  }
  func.func @transform_6(%arg0: i32) -> (i32, i32) {
    %c0_i32 = arith.constant 0 : i32
    %c0_i32_0 = arith.constant 0 : i32
    %c0_i32_1 = arith.constant 0 : i32
    return %c0_i32, %c0_i32_0 : i32, i32
  }
  func.func @transform_7(%arg0: i32) -> (i32, i32) {
    %c0_i32 = arith.constant 0 : i32
    %c0_i32_0 = arith.constant 0 : i32
    %c0_i32_1 = arith.constant 0 : i32
    return %c0_i32, %c0_i32_0 : i32, i32
  }
  func.func @transform_8(%arg0: i32) -> (i32, i32) {
    %c0_i32 = arith.constant 0 : i32
    %c0_i32_0 = arith.constant 0 : i32
    %c0_i32_1 = arith.constant 0 : i32
    return %c0_i32, %c0_i32_0 : i32, i32
  }
  func.func @transform_9(%arg0: i32) -> (i32, i32) {
    %c0_i32 = arith.constant 0 : i32
    %c0_i32_0 = arith.constant 0 : i32
    %c0_i32_1 = arith.constant 0 : i32
    return %c0_i32, %c0_i32_0 : i32, i32
  }
  func.func @transform_10(%arg0: i32) -> (i32, i32) {
    %c0_i32 = arith.constant 0 : i32
    %c0_i32_0 = arith.constant 0 : i32
    %c0_i32_1 = arith.constant 0 : i32
    return %c0_i32, %c0_i32_0 : i32, i32
  }
  func.func @transform_11(%arg0: i32) -> (i32, i32) {
    %c0_i32 = arith.constant 0 : i32
    %c0_i32_0 = arith.constant 0 : i32
    return %arg0, %c0_i32 : i32, i32
  }
}

</mosaic_0001>

<llo_original>
// kernel: fully_connected_forward.1
$region0: #{fully_connected_forward.1}
  #allocation0 [shape = 'u32[]', space=smem, size = 0x4, offset = 0x4, fixed_abs, tag = 'smem constant byte address 0x4 - core index']
  #allocation1 [shape = 'u32[72,128]{1,0:T(1,128)}', space=vmem, size = 0x9000, scoped, tag = 'internal scratch']
  %s0 = inlined_call_operand.vmem [shape: bf16[16,1024], index: 0, kind: input, shape index: {}]
  %s1 = inlined_call_operand.hbm [shape: bf16[1024,128], index: 1, kind: input, shape index: {}]
  %s2 = inlined_call_operand.vmem [shape: f32[1,128], index: 2, kind: input, shape index: {}]
  %s3 = inlined_call_operand.vmem [shape: f32[1,128], index: 3, kind: input, shape index: {}]
  %s4 = inlined_call_operand.vmem [shape: f32[1,128], index: 4, kind: input, shape index: {}, may-alias: {4,8}]
  %s5 = inlined_call_operand.vmem [shape: bf16[128,128], index: 5, kind: input, shape index: {}]
  %s6 = inlined_call_operand.vmem [shape: f32[1,128], index: 6, kind: input, shape index: {}]
  %s7 = inlined_call_operand.vmem [shape: f32[1,128], index: 7, kind: input, shape index: {}]
  %s8 = inlined_call_operand.vmem [shape: f32[1,128], index: 8, kind: input, shape index: {}, may-alias: {4,8}]
  %s9 = inlined_call_operand.vmem [shape: bf16[128,128], index: 9, kind: input, shape index: {}]
  %s10 = inlined_call_operand.vmem [shape: f32[1,128], index: 10, kind: input, shape index: {}]
  %s11 = inlined_call_operand.vmem [shape: f32[16,128], index: 11, kind: output, shape index: {}]
  %s12 = sld [smem:[#allocation0]]
  $region58: #{fully_connected_forward.1} parent=0
    _
  %s14 = ssub.s32 1, %s12
  %s15 = scalar_select 0, %s14, %s12
  $region1: #{fully_connected_forward.1} parent=0
    #allocation2 [shape = 'u8[262144]{0}', space=vmem, size = 0x40000, scoped, tag = 'input window, operand 1, single buffered']
    #allocation3 [shape = 's32[1]{0}', space=sflag, size = 0x4, scoped, tag = 'scoped memory for fully_connected_forward.1']
    %16 = vsyncpa [#allocation3], 0
    // Predicated region
    $region2: #{fully_connected_forward.1} parent=1 // pred_check
      _
    $region3: #{fully_connected_forward.1} parent=1 // pred_check_branch
      %18 = sbr.rel (0) target = $region5
    $region4: #{fully_connected_forward.1} parent=1 // pred_region
      _
    $region5: #{fully_connected_forward.1} parent=1 // pred_fallthru
      _
    // Predicated region
    $region6: #{fully_connected_forward.1} parent=1 // pred_check
      _
    $region7: #{fully_connected_forward.1} parent=1 // pred_check_branch
      %20 = sbr.rel (0) target = $region9
    $region8: #{fully_connected_forward.1} parent=1 // pred_region
      %22 = vsyncadd [#allocation3], 0
      %s23 = sshll.u32 %s1, 4
      %s24 = int_to_ptr.hbm [resolvable:$true] %s23
      %s25 = sshll.u32 [#allocation2], 4
      %s26 = int_to_ptr.vmem [resolvable:$true] %s25
      %31 = dma.hbm_to_vmem [thread:$0]  %s24, 8192, %s26, [#allocation3], 64, 64, 4
    $region9: #{fully_connected_forward.1} parent=1 // pred_fallthru
      _
    // Predicated region
    $region10: #{fully_connected_forward.1} parent=1 // pred_check
      _
    $region11: #{fully_connected_forward.1} parent=1 // pred_check_branch
      %33 = sbr.rel (0) target = $region13
    $region12: #{fully_connected_forward.1} parent=1 // pred_region
      _
    $region13: #{fully_connected_forward.1} parent=1 // pred_fallthru
      _
    // Predicated region
    $region14: #{fully_connected_forward.1} parent=1 // pred_check
      _
    $region15: #{fully_connected_forward.1} parent=1 // pred_check_branch
      %35 = sbr.rel (0) target = $region17
    $region16: #{fully_connected_forward.1} parent=1 // pred_region
      _
    $region17: #{fully_connected_forward.1} parent=1 // pred_fallthru
      _
    // Predicated region
    $region18: #{fully_connected_forward.1} parent=1 // pred_check
      _
    $region19: #{fully_connected_forward.1} parent=1 // pred_check_branch
      %37 = sbr.rel (0) target = $region21
    $region20: #{fully_connected_forward.1} parent=1 // pred_region
      _
    $region21: #{fully_connected_forward.1} parent=1 // pred_fallthru
      _
    // Predicated region
    $region22: #{fully_connected_forward.1} parent=1 // pred_check
      _
    $region23: #{fully_connected_forward.1} parent=1 // pred_check_branch
      %39 = sbr.rel (0) target = $region25
    $region24: #{fully_connected_forward.1} parent=1 // pred_region
      _
    $region25: #{fully_connected_forward.1} parent=1 // pred_fallthru
      _
    // Predicated region
    $region26: #{fully_connected_forward.1} parent=1 // pred_check
      _
    $region27: #{fully_connected_forward.1} parent=1 // pred_check_branch
      %41 = sbr.rel (0) target = $region29
    $region28: #{fully_connected_forward.1} parent=1 // pred_region
      _
    $region29: #{fully_connected_forward.1} parent=1 // pred_fallthru
      _
    // Predicated region
    $region30: #{fully_connected_forward.1} parent=1 // pred_check
      _
    $region31: #{fully_connected_forward.1} parent=1 // pred_check_branch
      %43 = sbr.rel (0) target = $region33
    $region32: #{fully_connected_forward.1} parent=1 // pred_region
      _
    $region33: #{fully_connected_forward.1} parent=1 // pred_fallthru
      _
    // Predicated region
    $region34: #{fully_connected_forward.1} parent=1 // pred_check
      _
    $region35: #{fully_connected_forward.1} parent=1 // pred_check_branch
      %45 = sbr.rel (0) target = $region37
    $region36: #{fully_connected_forward.1} parent=1 // pred_region
      _
    $region37: #{fully_connected_forward.1} parent=1 // pred_fallthru
      _
    // Predicated region
    $region38: #{fully_connected_forward.1} parent=1 // pred_check
      _
    $region39: #{fully_connected_forward.1} parent=1 // pred_check_branch
      %47 = sbr.rel (0) target = $region41
    $region40: #{fully_connected_forward.1} parent=1 // pred_region
      _
    $region41: #{fully_connected_forward.1} parent=1 // pred_fallthru
      _
    // Predicated region
    $region42: #{fully_connected_forward.1} parent=1 // pred_check
      _
    $region43: #{fully_connected_forward.1} parent=1 // pred_check_branch
      %49 = sbr.rel (0) target = $region45
    $region44: #{fully_connected_forward.1} parent=1 // pred_region
      _
    $region45: #{fully_connected_forward.1} parent=1 // pred_fallthru
      _
    // Predicated region
    $region46: #{fully_connected_forward.1} parent=1 // pred_check
      _
    $region47: #{fully_connected_forward.1} parent=1 // pred_check_branch
      %51 = sbr.rel (0) target = $region49
    $region48: #{fully_connected_forward.1} parent=1 // pred_region
      %53 = dma.done [#allocation3], 8192
    $region49: #{fully_connected_forward.1} parent=1 // pred_fallthru
      _
    %v54 = vld [vmem:[%s0] sm:$0xff]
    %v55 = vld [vmem:[%s0 + $0x8] sm:$0xff]
    %v56 = vld [vmem:[%s0 + $0x10] sm:$0xff]
    %v57 = vld [vmem:[%s0 + $0x18] sm:$0xff]
    %v58 = vld [vmem:[%s0 + $0x20] sm:$0xff]
    %v59 = vld [vmem:[%s0 + $0x28] sm:$0xff]
    %v60 = vld [vmem:[%s0 + $0x30] sm:$0xff]
    %v61 = vld [vmem:[%s0 + $0x38] sm:$0xff]
    %v62 = vld [vmem:[#allocation2] sm:$0xf]
    %v63 = vld [vmem:[#allocation2 + $0x4] sm:$0xf]
    %v64 = vld [vmem:[#allocation2 + $0x8] sm:$0xf]
    %v65 = vld [vmem:[#allocation2 + $0xc] sm:$0xf]
    %v66 = vld [vmem:[#allocation2 + $0x10] sm:$0xf]
    %v67 = vld [vmem:[#allocation2 + $0x14] sm:$0xf]
    %v68 = vld [vmem:[#allocation2 + $0x18] sm:$0xf]
    %v69 = vld [vmem:[#allocation2 + $0x1c] sm:$0xf]
    %v70 = vld [vmem:[#allocation2 + $0x20] sm:$0xf]
    %v71 = vld [vmem:[#allocation2 + $0x24] sm:$0xf]
    %v72 = vld [vmem:[#allocation2 + $0x28] sm:$0xf]
    %v73 = vld [vmem:[#allocation2 + $0x2c] sm:$0xf]
    %v74 = vld [vmem:[#allocation2 + $0x30] sm:$0xf]
    %v75 = vld [vmem:[#allocation2 + $0x34] sm:$0xf]
    %v76 = vld [vmem:[#allocation2 + $0x38] sm:$0xf]
    %v77 = vld [vmem:[#allocation2 + $0x3c] sm:$0xf]
    %v78 = vld [vmem:[#allocation2 + $0x40] sm:$0xf]
    %v79 = vld [vmem:[#allocation2 + $0x44] sm:$0xf]
    %v80 = vld [vmem:[#allocation2 + $0x48] sm:$0xf]
    %v81 = vld [vmem:[#allocation2 + $0x4c] sm:$0xf]
    %v82 = vld [vmem:[#allocation2 + $0x50] sm:$0xf]
    %v83 = vld [vmem:[#allocation2 + $0x54] sm:$0xf]
    %v84 = vld [vmem:[#allocation2 + $0x58] sm:$0xf]
    %v85 = vld [vmem:[#allocation2 + $0x5c] sm:$0xf]
    %v86 = vld [vmem:[#allocation2 + $0x60] sm:$0xf]
    %v87 = vld [vmem:[#allocation2 + $0x64] sm:$0xf]
    %v88 = vld [vmem:[#allocation2 + $0x68] sm:$0xf]
    %v89 = vld [vmem:[#allocation2 + $0x6c] sm:$0xf]
    %v90 = vld [vmem:[#allocation2 + $0x70] sm:$0xf]
    %v91 = vld [vmem:[#allocation2 + $0x74] sm:$0xf]
    %v92 = vld [vmem:[#allocation2 + $0x78] sm:$0xf]
    %v93 = vld [vmem:[#allocation2 + $0x7c] sm:$0xf]
    %v94 = vld [vmem:[#allocation2 + $0x80] sm:$0xf]
    %v95 = vld [vmem:[#allocation2 + $0x84] sm:$0xf]
    %v96 = vld [vmem:[#allocation2 + $0x88] sm:$0xf]
    %v97 = vld [vmem:[#allocation2 + $0x8c] sm:$0xf]
    %v98 = vld [vmem:[#allocation2 + $0x90] sm:$0xf]
    %v99 = vld [vmem:[#allocation2 + $0x94] sm:$0xf]
    %v100 = vld [vmem:[#allocation2 + $0x98] sm:$0xf]
    %v101 = vld [vmem:[#allocation2 + $0x9c] sm:$0xf]
    %v102 = vld [vmem:[#allocation2 + $0xa0] sm:$0xf]
    %v103 = vld [vmem:[#allocation2 + $0xa4] sm:$0xf]
    %v104 = vld [vmem:[#allocation2 + $0xa8] sm:$0xf]
    %v105 = vld [vmem:[#allocation2 + $0xac] sm:$0xf]
    %v106 = vld [vmem:[#allocation2 + $0xb0] sm:$0xf]
    %v107 = vld [vmem:[#allocation2 + $0xb4] sm:$0xf]
    %v108 = vld [vmem:[#allocation2 + $0xb8] sm:$0xf]
    %v109 = vld [vmem:[#allocation2 + $0xbc] sm:$0xf]
    %v110 = vld [vmem:[#allocation2 + $0xc0] sm:$0xf]
    %v111 = vld [vmem:[#allocation2 + $0xc4] sm:$0xf]
    %v112 = vld [vmem:[#allocation2 + $0xc8] sm:$0xf]
    %v113 = vld [vmem:[#allocation2 + $0xcc] sm:$0xf]
    %v114 = vld [vmem:[#allocation2 + $0xd0] sm:$0xf]
    %v115 = vld [vmem:[#allocation2 + $0xd4] sm:$0xf]
    %v116 = vld [vmem:[#allocation2 + $0xd8] sm:$0xf]
    %v117 = vld [vmem:[#allocation2 + $0xdc] sm:$0xf]
    %v118 = vld [vmem:[#allocation2 + $0xe0] sm:$0xf]
    %v119 = vld [vmem:[#allocation2 + $0xe4] sm:$0xf]
    %v120 = vld [vmem:[#allocation2 + $0xe8] sm:$0xf]
    %v121 = vld [vmem:[#allocation2 + $0xec] sm:$0xf]
    %v122 = vld [vmem:[#allocation2 + $0xf0] sm:$0xf]
    %v123 = vld [vmem:[#allocation2 + $0xf4] sm:$0xf]
    %v124 = vld [vmem:[#allocation2 + $0xf8] sm:$0xf]
    %v125 = vld [vmem:[#allocation2 + $0xfc] sm:$0xf]
    %v126 = vld [vmem:[#allocation2 + $0x100] sm:$0xf]
    %v127 = vld [vmem:[#allocation2 + $0x104] sm:$0xf]
    %v128 = vld [vmem:[#allocation2 + $0x108] sm:$0xf]
    %v129 = vld [vmem:[#allocation2 + $0x10c] sm:$0xf]
    %v130 = vld [vmem:[#allocation2 + $0x110] sm:$0xf]
    %v131 = vld [vmem:[#allocation2 + $0x114] sm:$0xf]
    %v132 = vld [vmem:[#allocation2 + $0x118] sm:$0xf]
    %v133 = vld [vmem:[#allocation2 + $0x11c] sm:$0xf]
    %v134 = vld [vmem:[#allocation2 + $0x120] sm:$0xf]
    %v135 = vld [vmem:[#allocation2 + $0x124] sm:$0xf]
    %v136 = vld [vmem:[#allocation2 + $0x128] sm:$0xf]
    %v137 = vld [vmem:[#allocation2 + $0x12c] sm:$0xf]
    %v138 = vld [vmem:[#allocation2 + $0x130] sm:$0xf]
    %v139 = vld [vmem:[#allocation2 + $0x134] sm:$0xf]
    %v140 = vld [vmem:[#allocation2 + $0x138] sm:$0xf]
    %v141 = vld [vmem:[#allocation2 + $0x13c] sm:$0xf]
    %v142 = vld [vmem:[#allocation2 + $0x140] sm:$0xf]
    %v143 = vld [vmem:[#allocation2 + $0x144] sm:$0xf]
    %v144 = vld [vmem:[#allocation2 + $0x148] sm:$0xf]
    %v145 = vld [vmem:[#allocation2 + $0x14c] sm:$0xf]
    %v146 = vld [vmem:[#allocation2 + $0x150] sm:$0xf]
    %v147 = vld [vmem:[#allocation2 + $0x154] sm:$0xf]
    %v148 = vld [vmem:[#allocation2 + $0x158] sm:$0xf]
    %v149 = vld [vmem:[#allocation2 + $0x15c] sm:$0xf]
    %v150 = vld [vmem:[#allocation2 + $0x160] sm:$0xf]
    %v151 = vld [vmem:[#allocation2 + $0x164] sm:$0xf]
    %v152 = vld [vmem:[#allocation2 + $0x168] sm:$0xf]
    %v153 = vld [vmem:[#allocation2 + $0x16c] sm:$0xf]
    %v154 = vld [vmem:[#allocation2 + $0x170] sm:$0xf]
    %v155 = vld [vmem:[#allocation2 + $0x174] sm:$0xf]
    %v156 = vld [vmem:[#allocation2 + $0x178] sm:$0xf]
    %v157 = vld [vmem:[#allocation2 + $0x17c] sm:$0xf]
    %v158 = vld [vmem:[#allocation2 + $0x180] sm:$0xf]
    %v159 = vld [vmem:[#allocation2 + $0x184] sm:$0xf]
    %v160 = vld [vmem:[#allocation2 + $0x188] sm:$0xf]
    %v161 = vld [vmem:[#allocation2 + $0x18c] sm:$0xf]
    %v162 = vld [vmem:[#allocation2 + $0x190] sm:$0xf]
    %v163 = vld [vmem:[#allocation2 + $0x194] sm:$0xf]
    %v164 = vld [vmem:[#allocation2 + $0x198] sm:$0xf]
    %v165 = vld [vmem:[#allocation2 + $0x19c] sm:$0xf]
    %v166 = vld [vmem:[#allocation2 + $0x1a0] sm:$0xf]
    %v167 = vld [vmem:[#allocation2 + $0x1a4] sm:$0xf]
    %v168 = vld [vmem:[#allocation2 + $0x1a8] sm:$0xf]
    %v169 = vld [vmem:[#allocation2 + $0x1ac] sm:$0xf]
    %v170 = vld [vmem:[#allocation2 + $0x1b0] sm:$0xf]
    %v171 = vld [vmem:[#allocation2 + $0x1b4] sm:$0xf]
    %v172 = vld [vmem:[#allocation2 + $0x1b8] sm:$0xf]
    %v173 = vld [vmem:[#allocation2 + $0x1bc] sm:$0xf]
    %v174 = vld [vmem:[#allocation2 + $0x1c0] sm:$0xf]
    %v175 = vld [vmem:[#allocation2 + $0x1c4] sm:$0xf]
    %v176 = vld [vmem:[#allocation2 + $0x1c8] sm:$0xf]
    %v177 = vld [vmem:[#allocation2 + $0x1cc] sm:$0xf]
    %v178 = vld [vmem:[#allocation2 + $0x1d0] sm:$0xf]
    %v179 = vld [vmem:[#allocation2 + $0x1d4] sm:$0xf]
    %v180 = vld [vmem:[#allocation2 + $0x1d8] sm:$0xf]
    %v181 = vld [vmem:[#allocation2 + $0x1dc] sm:$0xf]
    %v182 = vld [vmem:[#allocation2 + $0x1e0] sm:$0xf]
    %v183 = vld [vmem:[#allocation2 + $0x1e4] sm:$0xf]
    %v184 = vld [vmem:[#allocation2 + $0x1e8] sm:$0xf]
    %v185 = vld [vmem:[#allocation2 + $0x1ec] sm:$0xf]
    %v186 = vld [vmem:[#allocation2 + $0x1f0] sm:$0xf]
    %v187 = vld [vmem:[#allocation2 + $0x1f4] sm:$0xf]
    %v188 = vld [vmem:[#allocation2 + $0x1f8] sm:$0xf]
    %v189 = vld [vmem:[#allocation2 + $0x1fc] sm:$0xf]
    %v190 = vld [vmem:[%s2] sm:$0x1]
    %v192 = vperm.slane %v190, 0
    %v202 = vunpack.c.l.b16 %v54
    %v203 = vunpack.c.h.b16 %v54
    %v204 = vunpack.c.l.b16 %v55
    %v205 = vunpack.c.h.b16 %v55
    %v206 = vunpack.c.l.b16 %v56
    %v207 = vunpack.c.h.b16 %v56
    %v208 = vunpack.c.l.b16 %v57
    %v209 = vunpack.c.h.b16 %v57
    %v210 = vunpack.c.l.b16 %v58
    %v211 = vunpack.c.h.b16 %v58
    %v212 = vunpack.c.l.b16 %v59
    %v213 = vunpack.c.h.b16 %v59
    %v214 = vunpack.c.l.b16 %v60
    %v215 = vunpack.c.h.b16 %v60
    %v216 = vunpack.c.l.b16 %v61
    %v217 = vunpack.c.h.b16 %v61
    %v218 = vpack.c.b16 %v210, %v202
    %v219 = vpack.c.b16 %v211, %v203
    %v220 = vpack.c.b16 %v212, %v204
    %v221 = vpack.c.b16 %v213, %v205
    %v222 = vpack.c.b16 %v214, %v206
    %v223 = vpack.c.b16 %v215, %v207
    %v224 = vpack.c.b16 %v216, %v208
    %v225 = vpack.c.b16 %v217, %v209
    %v362 = vunpack.c.l.b16 %v62
    %v363 = vunpack.c.l.b16 %v63
    %v364 = vunpack.c.l.b16 %v64
    %v365 = vunpack.c.l.b16 %v65
    %v366 = vunpack.c.l.b16 %v66
    %v367 = vunpack.c.l.b16 %v67
    %v368 = vunpack.c.l.b16 %v68
    %v369 = vunpack.c.l.b16 %v69
    %v370 = vunpack.c.l.b16 %v70
    %v371 = vunpack.c.l.b16 %v71
    %v372 = vunpack.c.l.b16 %v72
    %v373 = vunpack.c.l.b16 %v73
    %v374 = vunpack.c.l.b16 %v74
    %v375 = vunpack.c.l.b16 %v75
    %v376 = vunpack.c.l.b16 %v76
    %v377 = vunpack.c.l.b16 %v77
    %v378 = vunpack.c.l.b16 %v78
    %v379 = vunpack.c.l.b16 %v79
    %v380 = vunpack.c.l.b16 %v80
    %v381 = vunpack.c.l.b16 %v81
    %v382 = vunpack.c.l.b16 %v82
    %v383 = vunpack.c.l.b16 %v83
    %v384 = vunpack.c.l.b16 %v84
    %v385 = vunpack.c.l.b16 %v85
    %v386 = vunpack.c.l.b16 %v86
    %v387 = vunpack.c.l.b16 %v87
    %v388 = vunpack.c.l.b16 %v88
    %v389 = vunpack.c.l.b16 %v89
    %v390 = vunpack.c.l.b16 %v90
    %v391 = vunpack.c.l.b16 %v91
    %v392 = vunpack.c.l.b16 %v92
    %v393 = vunpack.c.l.b16 %v93
    %v394 = vunpack.c.l.b16 %v94
    %v395 = vunpack.c.l.b16 %v95
    %v396 = vunpack.c.l.b16 %v96
    %v397 = vunpack.c.l.b16 %v97
    %v398 = vunpack.c.l.b16 %v98
    %v399 = vunpack.c.l.b16 %v99
    %v400 = vunpack.c.l.b16 %v100
    %v401 = vunpack.c.l.b16 %v101
    %v402 = vunpack.c.l.b16 %v102
    %v403 = vunpack.c.l.b16 %v103
    %v404 = vunpack.c.l.b16 %v104
    %v405 = vunpack.c.l.b16 %v105
    %v406 = vunpack.c.l.b16 %v106
    %v407 = vunpack.c.l.b16 %v107
    %v408 = vunpack.c.l.b16 %v108
    %v409 = vunpack.c.l.b16 %v109
    %v410 = vunpack.c.l.b16 %v110
    %v411 = vunpack.c.l.b16 %v111
    %v412 = vunpack.c.l.b16 %v112
    %v413 = vunpack.c.l.b16 %v113
    %v414 = vunpack.c.l.b16 %v114
    %v415 = vunpack.c.l.b16 %v115
    %v416 = vunpack.c.l.b16 %v116
    %v417 = vunpack.c.l.b16 %v117
    %v418 = vunpack.c.l.b16 %v118
    %v419 = vunpack.c.l.b16 %v119
    %v420 = vunpack.c.l.b16 %v120
    %v421 = vunpack.c.l.b16 %v121
    %v422 = vunpack.c.l.b16 %v122
    %v423 = vunpack.c.l.b16 %v123
    %v424 = vunpack.c.l.b16 %v124
    %v425 = vunpack.c.l.b16 %v125
    %v426 = vunpack.c.l.b16 %v126
    %v427 = vunpack.c.l.b16 %v127
    %v428 = vunpack.c.l.b16 %v128
    %v429 = vunpack.c.l.b16 %v129
    %v430 = vunpack.c.l.b16 %v130
    %v431 = vunpack.c.l.b16 %v131
    %v432 = vunpack.c.l.b16 %v132
    %v433 = vunpack.c.l.b16 %v133
    %v434 = vunpack.c.l.b16 %v134
    %v435 = vunpack.c.l.b16 %v135
    %v436 = vunpack.c.l.b16 %v136
    %v437 = vunpack.c.l.b16 %v137
    %v438 = vunpack.c.l.b16 %v138
    %v439 = vunpack.c.l.b16 %v139
    %v440 = vunpack.c.l.b16 %v140
    %v441 = vunpack.c.l.b16 %v141
    %v442 = vunpack.c.l.b16 %v142
    %v443 = vunpack.c.l.b16 %v143
    %v444 = vunpack.c.l.b16 %v144
    %v445 = vunpack.c.l.b16 %v145
    %v446 = vunpack.c.l.b16 %v146
    %v447 = vunpack.c.l.b16 %v147
    %v448 = vunpack.c.l.b16 %v148
    %v449 = vunpack.c.l.b16 %v149
    %v450 = vunpack.c.l.b16 %v150
    %v451 = vunpack.c.l.b16 %v151
    %v452 = vunpack.c.l.b16 %v152
    %v453 = vunpack.c.l.b16 %v153
    %v454 = vunpack.c.l.b16 %v154
    %v455 = vunpack.c.l.b16 %v155
    %v456 = vunpack.c.l.b16 %v156
    %v457 = vunpack.c.l.b16 %v157
    %v458 = vunpack.c.l.b16 %v158
    %v459 = vunpack.c.l.b16 %v159
    %v460 = vunpack.c.l.b16 %v160
    %v461 = vunpack.c.l.b16 %v161
    %v462 = vunpack.c.l.b16 %v162
    %v463 = vunpack.c.l.b16 %v163
    %v464 = vunpack.c.l.b16 %v164
    %v465 = vunpack.c.l.b16 %v165
    %v466 = vunpack.c.l.b16 %v166
    %v467 = vunpack.c.l.b16 %v167
    %v468 = vunpack.c.l.b16 %v168
    %v469 = vunpack.c.l.b16 %v169
    %v470 = vunpack.c.l.b16 %v170
    %v471 = vunpack.c.l.b16 %v171
    %v472 = vunpack.c.l.b16 %v172
    %v473 = vunpack.c.l.b16 %v173
    %v474 = vunpack.c.l.b16 %v174
    %v475 = vunpack.c.l.b16 %v175
    %v476 = vunpack.c.l.b16 %v176
    %v477 = vunpack.c.l.b16 %v177
    %v478 = vunpack.c.l.b16 %v178
    %v479 = vunpack.c.l.b16 %v179
    %v480 = vunpack.c.l.b16 %v180
    %v481 = vunpack.c.l.b16 %v181
    %v482 = vunpack.c.l.b16 %v182
    %v483 = vunpack.c.l.b16 %v183
    %v484 = vunpack.c.l.b16 %v184
    %v485 = vunpack.c.l.b16 %v185
    %v486 = vunpack.c.l.b16 %v186
    %v487 = vunpack.c.l.b16 %v187
    %v488 = vunpack.c.l.b16 %v188
    %v489 = vunpack.c.l.b16 %v189
    %v490 = vpack.c.b16 %v363, %v362
    %v491 = vpack.c.b16 %v365, %v364
    %v492 = vpack.c.b16 %v367, %v366
    %v493 = vpack.c.b16 %v369, %v368
    %v494 = vpack.c.b16 %v371, %v370
    %v495 = vpack.c.b16 %v373, %v372
    %v496 = vpack.c.b16 %v375, %v374
    %v497 = vpack.c.b16 %v377, %v376
    %v498 = vpack.c.b16 %v379, %v378
    %v499 = vpack.c.b16 %v381, %v380
    %v500 = vpack.c.b16 %v383, %v382
    %v501 = vpack.c.b16 %v385, %v384
    %v502 = vpack.c.b16 %v387, %v386
    %v503 = vpack.c.b16 %v389, %v388
    %v504 = vpack.c.b16 %v391, %v390
    %v505 = vpack.c.b16 %v393, %v392
    %v506 = vpack.c.b16 %v395, %v394
    %v507 = vpack.c.b16 %v397, %v396
    %v508 = vpack.c.b16 %v399, %v398
    %v509 = vpack.c.b16 %v401, %v400
    %v510 = vpack.c.b16 %v403, %v402
    %v511 = vpack.c.b16 %v405, %v404
    %v512 = vpack.c.b16 %v407, %v406
    %v513 = vpack.c.b16 %v409, %v408
    %v514 = vpack.c.b16 %v411, %v410
    %v515 = vpack.c.b16 %v413, %v412
    %v516 = vpack.c.b16 %v415, %v414
    %v517 = vpack.c.b16 %v417, %v416
    %v518 = vpack.c.b16 %v419, %v418
    %v519 = vpack.c.b16 %v421, %v420
    %v520 = vpack.c.b16 %v423, %v422
    %v521 = vpack.c.b16 %v425, %v424
    %v522 = vpack.c.b16 %v427, %v426
    %v523 = vpack.c.b16 %v429, %v428
    %v524 = vpack.c.b16 %v431, %v430
    %v525 = vpack.c.b16 %v433, %v432
    %v526 = vpack.c.b16 %v435, %v434
    %v527 = vpack.c.b16 %v437, %v436
    %v528 = vpack.c.b16 %v439, %v438
    %v529 = vpack.c.b16 %v441, %v440
    %v530 = vpack.c.b16 %v443, %v442
    %v531 = vpack.c.b16 %v445, %v444
    %v532 = vpack.c.b16 %v447, %v446
    %v533 = vpack.c.b16 %v449, %v448
    %v534 = vpack.c.b16 %v451, %v450
    %v535 = vpack.c.b16 %v453, %v452
    %v536 = vpack.c.b16 %v455, %v454
    %v537 = vpack.c.b16 %v457, %v456
    %v538 = vpack.c.b16 %v459, %v458
    %v539 = vpack.c.b16 %v461, %v460
    %v540 = vpack.c.b16 %v463, %v462
    %v541 = vpack.c.b16 %v465, %v464
    %v542 = vpack.c.b16 %v467, %v466
    %v543 = vpack.c.b16 %v469, %v468
    %v544 = vpack.c.b16 %v471, %v470
    %v545 = vpack.c.b16 %v473, %v472
    %v546 = vpack.c.b16 %v475, %v474
    %v547 = vpack.c.b16 %v477, %v476
    %v548 = vpack.c.b16 %v479, %v478
    %v549 = vpack.c.b16 %v481, %v480
    %v550 = vpack.c.b16 %v483, %v482
    %v551 = vpack.c.b16 %v485, %v484
    %v552 = vpack.c.b16 %v487, %v486
    %v553 = vpack.c.b16 %v489, %v488
    %618 = vmatpush.bf16.msra.mxu0 %v497
    %619 = vmatpush.bf16.msra.mxu0 %v496
    %620 = vmatpush.bf16.msra.mxu0 %v495
    %621 = vmatpush.bf16.msra.mxu0 %v494
    %622 = vmatpush.bf16.msra.mxu0 %v493
    %623 = vmatpush.bf16.msra.mxu0 %v492
    %624 = vmatpush.bf16.msra.mxu0 %v491
    %625 = vmatpush.bf16.msra.mxu0 %v490
    %626 = vmatmul.bf16.gmra.mxu0 %v218
    %v627 = vpop.f32.mrf.mxu0
    %v628 = vadd.f32 %v192, %v627
    %v629 = vpop.f32.mrf.mxu0
    %v630 = vadd.f32 %v192, %v629
    %631 = vdwg.mxu0
    %632 = vmatpush.bf16.msra.mxu0 %v505
    %633 = vmatpush.bf16.msra.mxu0 %v504
    %634 = vmatpush.bf16.msra.mxu0 %v503
    %635 = vmatpush.bf16.msra.mxu0 %v502
    %636 = vmatpush.bf16.msra.mxu0 %v501
    %637 = vmatpush.bf16.msra.mxu0 %v500
    %638 = vmatpush.bf16.msra.mxu0 %v499
    %639 = vmatpush.bf16.msra.mxu0 %v498
    %640 = vmatmul.bf16.gmra.mxu0 %v219
    %v641 = vpop.f32.mrf.mxu0
    %v642 = vadd.f32 %v628, %v641
    %v643 = vpop.f32.mrf.mxu0
    %v644 = vadd.f32 %v630, %v643
    %645 = vdwg.mxu0
    %646 = vmatpush.bf16.msra.mxu0 %v513
    %647 = vmatpush.bf16.msra.mxu0 %v512
    %648 = vmatpush.bf16.msra.mxu0 %v511
    %649 = vmatpush.bf16.msra.mxu0 %v510
    %650 = vmatpush.bf16.msra.mxu0 %v509
    %651 = vmatpush.bf16.msra.mxu0 %v508
    %652 = vmatpush.bf16.msra.mxu0 %v507
    %653 = vmatpush.bf16.msra.mxu0 %v506
    %654 = vmatmul.bf16.gmra.mxu0 %v220
    %v655 = vpop.f32.mrf.mxu0
    %v656 = vadd.f32 %v642, %v655
    %v657 = vpop.f32.mrf.mxu0
    %v658 = vadd.f32 %v644, %v657
    %659 = vdwg.mxu0
    %660 = vmatpush.bf16.msra.mxu0 %v521
    %661 = vmatpush.bf16.msra.mxu0 %v520
    %662 = vmatpush.bf16.msra.mxu0 %v519
    %663 = vmatpush.bf16.msra.mxu0 %v518
    %664 = vmatpush.bf16.msra.mxu0 %v517
    %665 = vmatpush.bf16.msra.mxu0 %v516
    %666 = vmatpush.bf16.msra.mxu0 %v515
    %667 = vmatpush.bf16.msra.mxu0 %v514
    %668 = vmatmul.bf16.gmra.mxu0 %v221
    %v669 = vpop.f32.mrf.mxu0
    %v670 = vadd.f32 %v656, %v669
    %v671 = vpop.f32.mrf.mxu0
    %v672 = vadd.f32 %v658, %v671
    %673 = vdwg.mxu0
    %674 = vmatpush.bf16.msra.mxu0 %v529
    %675 = vmatpush.bf16.msra.mxu0 %v528
    %676 = vmatpush.bf16.msra.mxu0 %v527
    %677 = vmatpush.bf16.msra.mxu0 %v526
    %678 = vmatpush.bf16.msra.mxu0 %v525
    %679 = vmatpush.bf16.msra.mxu0 %v524
    %680 = vmatpush.bf16.msra.mxu0 %v523
    %681 = vmatpush.bf16.msra.mxu0 %v522
    %682 = vmatmul.bf16.gmra.mxu0 %v222
    %v683 = vpop.f32.mrf.mxu0
    %v684 = vadd.f32 %v670, %v683
    %v685 = vpop.f32.mrf.mxu0
    %v686 = vadd.f32 %v672, %v685
    %687 = vdwg.mxu0
    %688 = vmatpush.bf16.msra.mxu0 %v537
    %689 = vmatpush.bf16.msra.mxu0 %v536
    %690 = vmatpush.bf16.msra.mxu0 %v535
    %691 = vmatpush.bf16.msra.mxu0 %v534
    %692 = vmatpush.bf16.msra.mxu0 %v533
    %693 = vmatpush.bf16.msra.mxu0 %v532
    %694 = vmatpush.bf16.msra.mxu0 %v531
    %695 = vmatpush.bf16.msra.mxu0 %v530
    %696 = vmatmul.bf16.gmra.mxu0 %v223
    %v697 = vpop.f32.mrf.mxu0
    %v698 = vadd.f32 %v684, %v697
    %v699 = vpop.f32.mrf.mxu0
    %v700 = vadd.f32 %v686, %v699
    %701 = vdwg.mxu0
    %702 = vmatpush.bf16.msra.mxu0 %v545
    %703 = vmatpush.bf16.msra.mxu0 %v544
    %704 = vmatpush.bf16.msra.mxu0 %v543
    %705 = vmatpush.bf16.msra.mxu0 %v542
    %706 = vmatpush.bf16.msra.mxu0 %v541
    %707 = vmatpush.bf16.msra.mxu0 %v540
    %708 = vmatpush.bf16.msra.mxu0 %v539
    %709 = vmatpush.bf16.msra.mxu0 %v538
    %710 = vmatmul.bf16.gmra.mxu0 %v224
    %v711 = vpop.f32.mrf.mxu0
    %v712 = vadd.f32 %v698, %v711
    %v713 = vpop.f32.mrf.mxu0
    %v714 = vadd.f32 %v700, %v713
    %715 = vdwg.mxu0
    %716 = vmatpush.bf16.msra.mxu0 %v553
    %717 = vmatpush.bf16.msra.mxu0 %v552
    %718 = vmatpush.bf16.msra.mxu0 %v551
    %719 = vmatpush.bf16.msra.mxu0 %v550
    %720 = vmatpush.bf16.msra.mxu0 %v549
    %721 = vmatpush.bf16.msra.mxu0 %v548
    %722 = vmatpush.bf16.msra.mxu0 %v547
    %723 = vmatpush.bf16.msra.mxu0 %v546
    %724 = vmatmul.bf16.gmra.mxu0 %v225
    %v725 = vpop.f32.mrf.mxu0
    %v726 = vadd.f32 %v712, %v725
    %v727 = vpop.f32.mrf.mxu0
    %v728 = vadd.f32 %v714, %v727
    %729 = vdwg.mxu0
    %v730 = vmax.f32 %v726, 0.0
    %v731 = vmax.f32 %v728, 0.0
    %v732 = vld [vmem:[%s3] sm:$0x1]
    %v733 = vld [vmem:[%s4] sm:$0x1]
    %v735 = vperm.slane %v732, 0
    %v737 = vmul.f32 %v730, %v735
    %v738 = vmul.f32 %v731, %v735
    %v740 = vperm.slane %v733, 0
    %v742 = vadd.f32 %v737, %v740
    %v743 = vadd.f32 %v738, %v740
    %v744 = vld [vmem:[%s5] sm:$0xf]
    %v745 = vld [vmem:[%s5 + $0x4] sm:$0xf]
    %v746 = vld [vmem:[%s5 + $0x8] sm:$0xf]
    %v747 = vld [vmem:[%s5 + $0xc] sm:$0xf]
    %v748 = vld [vmem:[%s5 + $0x10] sm:$0xf]
    %v749 = vld [vmem:[%s5 + $0x14] sm:$0xf]
    %v750 = vld [vmem:[%s5 + $0x18] sm:$0xf]
    %v751 = vld [vmem:[%s5 + $0x1c] sm:$0xf]
    %v752 = vld [vmem:[%s5 + $0x20] sm:$0xf]
    %v753 = vld [vmem:[%s5 + $0x24] sm:$0xf]
    %v754 = vld [vmem:[%s5 + $0x28] sm:$0xf]
    %v755 = vld [vmem:[%s5 + $0x2c] sm:$0xf]
    %v756 = vld [vmem:[%s5 + $0x30] sm:$0xf]
    %v757 = vld [vmem:[%s5 + $0x34] sm:$0xf]
    %v758 = vld [vmem:[%s5 + $0x38] sm:$0xf]
    %v759 = vld [vmem:[%s5 + $0x3c] sm:$0xf]
    %v760 = vld [vmem:[%s6] sm:$0x1]
    %v761 = vpack.c.bf16 %v743, %v742
    %v763 = vperm.slane %v760, 0
    %v781 = vunpack.c.l.b16 %v744
    %v782 = vunpack.c.l.b16 %v745
    %v783 = vunpack.c.l.b16 %v746
    %v784 = vunpack.c.l.b16 %v747
    %v785 = vunpack.c.l.b16 %v748
    %v786 = vunpack.c.l.b16 %v749
    %v787 = vunpack.c.l.b16 %v750
    %v788 = vunpack.c.l.b16 %v751
    %v789 = vunpack.c.l.b16 %v752
    %v790 = vunpack.c.l.b16 %v753
    %v791 = vunpack.c.l.b16 %v754
    %v792 = vunpack.c.l.b16 %v755
    %v793 = vunpack.c.l.b16 %v756
    %v794 = vunpack.c.l.b16 %v757
    %v795 = vunpack.c.l.b16 %v758
    %v796 = vunpack.c.l.b16 %v759
    %v797 = vpack.c.b16 %v782, %v781
    %v798 = vpack.c.b16 %v784, %v783
    %v799 = vpack.c.b16 %v786, %v785
    %v800 = vpack.c.b16 %v788, %v787
    %v801 = vpack.c.b16 %v790, %v789
    %v802 = vpack.c.b16 %v792, %v791
    %v803 = vpack.c.b16 %v794, %v793
    %v804 = vpack.c.b16 %v796, %v795
    %813 = vmatpush.bf16.msra.mxu0 %v804
    %814 = vmatpush.bf16.msra.mxu0 %v803
    %815 = vmatpush.bf16.msra.mxu0 %v802
    %816 = vmatpush.bf16.msra.mxu0 %v801
    %817 = vmatpush.bf16.msra.mxu0 %v800
    %818 = vmatpush.bf16.msra.mxu0 %v799
    %819 = vmatpush.bf16.msra.mxu0 %v798
    %820 = vmatpush.bf16.msra.mxu0 %v797
    %821 = vmatmul.bf16.gmra.mxu0 %v761
    %v822 = vpop.f32.mrf.mxu0
    %v823 = vadd.f32 %v763, %v822
    %v824 = vpop.f32.mrf.mxu0
    %v825 = vadd.f32 %v763, %v824
    %826 = vdwg.mxu0
    %v827 = vld [vmem:[%s7] sm:$0x1]
    %v828 = vld [vmem:[%s8] sm:$0x1]
    %v829 = vlaneseq
    %v830 = vand.u32 %v829, 127
    %vm831 = vcmp.lt.s32.totalorder %v830, 32
    %832 = vadd.xlane.f32.xlu0 %v823
    %v833 = vpop.xlane.xlu0 %832
    %834 = vadd.xlane.f32.xlu0 %v825
    %v835 = vpop.xlane.xlu0 %834
    %v836 = vmul.f32 %v833, 0.03125
    %v837 = vmul.f32 %v835, 0.03125
    %v838 = vsub.f32 %v823, %v836
    %v839 = vsub.f32 %v825, %v837
    %v840 = vsel %vm831, %v838, 0.0
    %v841 = vsel %vm831, %v839, 0.0
    %v842 = vmul.f32 %v840, %v840
    %v843 = vmul.f32 %v841, %v841
    %844 = vadd.xlane.f32.xlu0 %v842
    %v845 = vpop.xlane.xlu0 %844
    %846 = vadd.xlane.f32.xlu0 %v843
    %v847 = vpop.xlane.xlu0 %846
    %v848 = vmul.f32 %v845, 0.03125
    %v849 = vmul.f32 %v847, 0.03125
    %v850 = vadd.f32 %v848, 1e-05
    %v851 = vadd.f32 %v849, 1e-05
    %v852 = vrsqrt.pop %v850
    %v853 = vmul.f32 %v852, %v850
    %v854 = vmul.f32 %v853, %v852
    %v855 = vmul.f32 0.5, %v854
    %v856 = vsub.f32 1.5, %v855
    %v857 = vmul.f32 %v852, %v856
    %vm858 = vweird.f32 %v850
    %vm859 = vweird.f32 %v852
    %vm860 = vmor %vm858, %vm859
    %v861 = vsel %vm860, %v852, %v857
    %v862 = vrsqrt.pop %v851
    %v863 = vmul.f32 %v862, %v851
    %v864 = vmul.f32 %v863, %v862
    %v865 = vmul.f32 0.5, %v864
    %v866 = vsub.f32 1.5, %v865
    %v867 = vmul.f32 %v862, %v866
    %vm868 = vweird.f32 %v851
    %vm869 = vweird.f32 %v862
    %vm870 = vmor %vm868, %vm869
    %v871 = vsel %vm870, %v862, %v867
    %v872 = vmul.f32 %v838, %v861
    %v873 = vmul.f32 %v839, %v871
    %v875 = vperm.slane %v827, 0
    %v877 = vmul.f32 %v872, %v875
    %v878 = vmul.f32 %v873, %v875
    %v880 = vperm.slane %v828, 0
    %v882 = vadd.f32 %v877, %v880
    %v883 = vadd.f32 %v878, %v880
    %v884 = vtanh.pop %v882
    %v885 = vtanh.pop %v883
    %v886 = vsub.f32 0.0, %v884
    %v887 = vsub.f32 0.0, %v885
    %v888 = vmul.f32 %v886, 1.442695
    %v889 = vpow.pop %v888
    %v890 = vmul.f32 %v887, 1.442695
    %v891 = vpow.pop %v890
    %v892 = vadd.f32 %v889, 1.0
    %v893 = vadd.f32 %v891, 1.0
    %v894 = vrcp.pop %v892
    %v895 = vmul.f32 %v892, %v894
    %v896 = vsub.f32 1.0, %v895
    %v897 = vmul.f32 %v894, %v896
    %v898 = vadd.f32 %v894, %v897
    %vm899 = vweird.f32 %v892
    %vm900 = vweird.f32 %v894
    %vm901 = vmor %vm899, %vm900
    %v902 = vsel %vm901, %v894, %v898
    %v903 = vand.u32 2147483647, %v892
    %vm904 = vcmp.eq.f32.partialorder %v903, 8.507059e+37
    %v905 = vand.u32 %v892, 2147483648
    %v906 = vor.u32 1.1754944e-38, %v905
    %v907 = vsel %vm904, %v906, %v902
    %v908 = vmul.f32 1.0, %v907
    %v909 = vrcp.pop %v893
    %v910 = vmul.f32 %v893, %v909
    %v911 = vsub.f32 1.0, %v910
    %v912 = vmul.f32 %v909, %v911
    %v913 = vadd.f32 %v909, %v912
    %vm914 = vweird.f32 %v893
    %vm915 = vweird.f32 %v909
    %vm916 = vmor %vm914, %vm915
    %v917 = vsel %vm916, %v909, %v913
    %v918 = vand.u32 2147483647, %v893
    %vm919 = vcmp.eq.f32.partialorder %v918, 8.507059e+37
    %v920 = vand.u32 %v893, 2147483648
    %v921 = vor.u32 1.1754944e-38, %v920
    %v922 = vsel %vm919, %v921, %v917
    %v923 = vmul.f32 1.0, %v922
    %v924 = vld [vmem:[%s9] sm:$0xf]
    %v925 = vld [vmem:[%s9 + $0x4] sm:$0xf]
    %v926 = vld [vmem:[%s9 + $0x8] sm:$0xf]
    %v927 = vld [vmem:[%s9 + $0xc] sm:$0xf]
    %v928 = vld [vmem:[%s9 + $0x10] sm:$0xf]
    %v929 = vld [vmem:[%s9 + $0x14] sm:$0xf]
    %v930 = vld [vmem:[%s9 + $0x18] sm:$0xf]
    %v931 = vld [vmem:[%s9 + $0x1c] sm:$0xf]
    %v932 = vld [vmem:[%s9 + $0x20] sm:$0xf]
    %v933 = vld [vmem:[%s9 + $0x24] sm:$0xf]
    %v934 = vld [vmem:[%s9 + $0x28] sm:$0xf]
    %v935 = vld [vmem:[%s9 + $0x2c] sm:$0xf]
    %v936 = vld [vmem:[%s9 + $0x30] sm:$0xf]
    %v937 = vld [vmem:[%s9 + $0x34] sm:$0xf]
    %v938 = vld [vmem:[%s9 + $0x38] sm:$0xf]
    %v939 = vld [vmem:[%s9 + $0x3c] sm:$0xf]
    %v940 = vld [vmem:[%s10] sm:$0x1]
    %v941 = vpack.c.bf16 %v923, %v908
    %v943 = vperm.slane %v940, 0
    %v961 = vunpack.c.l.b16 %v924
    %v962 = vunpack.c.l.b16 %v925
    %v963 = vunpack.c.l.b16 %v926
    %v964 = vunpack.c.l.b16 %v927
    %v965 = vunpack.c.l.b16 %v928
    %v966 = vunpack.c.l.b16 %v929
    %v967 = vunpack.c.l.b16 %v930
    %v968 = vunpack.c.l.b16 %v931
    %v969 = vunpack.c.l.b16 %v932
    %v970 = vunpack.c.l.b16 %v933
    %v971 = vunpack.c.l.b16 %v934
    %v972 = vunpack.c.l.b16 %v935
    %v973 = vunpack.c.l.b16 %v936
    %v974 = vunpack.c.l.b16 %v937
    %v975 = vunpack.c.l.b16 %v938
    %v976 = vunpack.c.l.b16 %v939
    %v977 = vpack.c.b16 %v962, %v961
    %v978 = vpack.c.b16 %v964, %v963
    %v979 = vpack.c.b16 %v966, %v965
    %v980 = vpack.c.b16 %v968, %v967
    %v981 = vpack.c.b16 %v970, %v969
    %v982 = vpack.c.b16 %v972, %v971
    %v983 = vpack.c.b16 %v974, %v973
    %v984 = vpack.c.b16 %v976, %v975
    %993 = vmatpush.bf16.msra.mxu0 %v984
    %994 = vmatpush.bf16.msra.mxu0 %v983
    %995 = vmatpush.bf16.msra.mxu0 %v982
    %996 = vmatpush.bf16.msra.mxu0 %v981
    %997 = vmatpush.bf16.msra.mxu0 %v980
    %998 = vmatpush.bf16.msra.mxu0 %v979
    %999 = vmatpush.bf16.msra.mxu0 %v978
    %1000 = vmatpush.bf16.msra.mxu0 %v977
    %1001 = vmatmul.bf16.gmra.mxu0 %v941
    %v1002 = vpop.f32.mrf.mxu0
    %v1003 = vadd.f32 %v943, %v1002
    %v1004 = vpop.f32.mrf.mxu0
    %v1005 = vadd.f32 %v943, %v1004
    %1006 = vdwg.mxu0
    %1007 = vst [vmem:[%s11] sm:$0xff] %v1003
    %1008 = vst [vmem:[%s11 + $0x8] sm:$0xff] %v1005
    // Predicated region
    $region50: #{fully_connected_forward.1} parent=1 // pred_check
      _
    $region51: #{fully_connected_forward.1} parent=1 // pred_check_branch
      %1010 = sbr.rel (0) target = $region53
    $region52: #{fully_connected_forward.1} parent=1 // pred_region
      _
    $region53: #{fully_connected_forward.1} parent=1 // pred_fallthru
      _
    // Predicated region
    $region54: #{fully_connected_forward.1} parent=1 // pred_check
      _
    $region55: #{fully_connected_forward.1} parent=1 // pred_check_branch
      %1012 = sbr.rel (0) target = $region57
    $region56: #{fully_connected_forward.1} parent=1 // pred_region
      _
    $region57: #{fully_connected_forward.1} parent=1 // pred_fallthru
      _
    %1013 = vsyncpa [#allocation3], 1

</llo_original>
